<compile_context>
chip_gen: v7x
topology: tpu7x:2x2x1
jax: 0.10.0
libtpu: 0.0.40
codegen_flags: <defaults>
</compile_context>

<pallas_src>
import functools

import jax
import jax.numpy as jnp
from jax.experimental import pallas as pl
from jax.experimental.pallas import tpu as pltpu

C_IN, C_OUT, K, STRIDE, PAD = 3, 3, 3, 2, 1
LANES = 128
CH = 8  # rows per register chunk (one f32 sublane group)

# Polyphase taps.  For the input view x[m+s, n+t] (s = row shift, t = col
# shift) the list of (phase=(a, b), kh, kw) it contributes to, where phase
# (a, b) is output pixel (2m+a, 2n+b) and the weight is W[c_in, c_out, kh, kw]
# in raw PyTorch ConvTranspose2d layout.
TAPS = {
    (0, 0): (((0, 0), 1, 1), ((0, 1), 1, 2), ((1, 0), 2, 1), ((1, 1), 2, 2)),
    (0, 1): (((0, 1), 1, 0), ((1, 1), 2, 0)),
    (1, 0): (((1, 0), 0, 1), ((1, 1), 0, 2)),
    (1, 1): (((1, 1), 0, 0),),
}


def convt_kernel(w_ref, b_ref, x_ref, o_ref, *, col_shift):
    # w_ref : (C_IN*C_OUT*K*K,) f32, SMEM (scalar prefetch)
    # b_ref : (C_OUT,)          f32, SMEM (scalar prefetch)
    # x_ref : (C_IN, 2, TH, Wp) f32, VMEM; axis 1 = row shift (x[m], x[m+1])
    # o_ref : (C_OUT, 2, 2, TH, Wp) f32, VMEM; axes 1,2 = (row phase, col phase)
    TH, Wp = x_ref.shape[2], x_ref.shape[3]

    # Hoisted bias vregs: 3 per grid step, reused by every chunk and phase.
    bias = [jnp.full((CH, Wp), b_ref[o], dtype=jnp.float32) for o in range(C_OUT)]

    for t in range(TH // CH):  # register-sized row chunks
        r0 = t * CH
        acc = [[None] * 4 for _ in range(C_OUT)]  # lazily-initialized accumulators

        for c in range(C_IN):
            for s in range(2):  # row shift
                xr = x_ref[c, s, pl.ds(r0, CH), :]           # (CH, Wp)
                # +1 column shift on the XLU; the wrapped lane lands on the
                # zero-padding column (Wp > W guaranteed), so it is harmless.
                xc = pltpu.roll(xr, col_shift, axis=1)
                for tcol, xv in ((0, xr), (1, xc)):
                    for (a, b), kh, kw in TAPS[(s, tcol)]:
                        ph = 2 * a + b
                        for o in range(C_OUT):
                            w = w_ref[((c * C_OUT + o) * K + kh) * K + kw]
                            contrib = w * xv
                            acc[o][ph] = (contrib if acc[o][ph] is None
                                          else acc[o][ph] + contrib)

        for o in range(C_OUT):
            for ph in range(4):
                # fused epilogue: +bias -> relu -> tanh (abs is a no-op).
                o_ref[o, ph // 2, ph % 2, pl.ds(r0, CH), :] = jnp.tanh(
                    jnp.maximum(acc[o][ph] + bias[o], 0.0))


def _roll_matches_jnp():
    """Probe pltpu.roll's rotation convention on-device (once, outside jit)."""
    def k(x_ref, o_ref):
        o_ref[...] = pltpu.roll(x_ref[...], 1, axis=1)

    x = jnp.tile(jnp.arange(LANES, dtype=jnp.float32)[None, :], (CH, 1))
    out = pl.pallas_call(
        k, out_shape=jax.ShapeDtypeStruct((CH, LANES), jnp.float32))(x)
    # jnp.roll convention: out[0, 0] == LANES - 1 ; opposite: out[0, 0] == 1.
    return bool(out[0, 0] > LANES / 2)


def model_forward(x, weight, bias, *, roll_like_jnp=True):
    """x: (N, C_in, H, W); weight: (C_in, C_out, K, K) (PyTorch layout); bias: (C_out,)."""
    N, Cin, H, W = x.shape
    assert Cin == C_IN
    Ho = (H - 1) * STRIDE - 2 * PAD + K  # = 2H - 1
    Wo = (W - 1) * STRIDE - 2 * PAD + K  # = 2W - 1

    # Lane padding: at least one zero column so the +1 column shift reads zeros.
    Wp = ((W + 1 + LANES - 1) // LANES) * LANES
    # Row tile: multiple of 8, small enough that the double-buffered in+out
    # blocks stay a few hundred KiB (safe for v5e 16 MiB / v7x 64 MiB VMEM),
    # with an inner 8-row chunk loop keeping live vregs bounded.
    Hp = ((H + CH - 1) // CH) * CH
    TH = CH if Hp <= 4 * CH else min(Hp, 64)
    Hp = ((Hp + TH - 1) // TH) * TH

    xf = x.astype(jnp.float32)
    xp = jnp.pad(xf, ((0, 0), (0, 0), (0, Hp + 1 - H), (0, Wp - W)))
    # Only the +1-row shifted copy is pre-built (2x input traffic, not 4x);
    # this sidesteps inter-tile row halos. Column shift happens in-kernel.
    xs = jnp.stack([xp[:, :, 0:Hp, :], xp[:, :, 1:Hp + 1, :]], axis=2)  # (N,C,2,Hp,Wp)

    w_flat = weight.astype(jnp.float32).reshape(-1)  # (C_IN*C_OUT*K*K,)
    b = bias.astype(jnp.float32)

    col_shift = (Wp - 1) if roll_like_jnp else 1

    grid_spec = pltpu.PrefetchScalarGridSpec(
        num_scalar_prefetch=2,
        grid=(N, Hp // TH),
        in_specs=[
            pl.BlockSpec((None, C_IN, 2, TH, Wp),
                         lambda n, r, wref, bref: (n, 0, 0, r, 0)),
        ],
        out_specs=pl.BlockSpec((None, C_OUT, 2, 2, TH, Wp),
                               lambda n, r, wref, bref: (n, 0, 0, 0, r, 0)),
    )

    out = pl.pallas_call(
        functools.partial(convt_kernel, col_shift=col_shift),
        grid_spec=grid_spec,
        out_shape=jax.ShapeDtypeStruct((N, C_OUT, 2, 2, Hp, Wp), jnp.float32),
        compiler_params=pltpu.CompilerParams(
            dimension_semantics=("parallel", "parallel")),
    )(w_flat, b, xs)

    # Phase interleave back to (N, C_out, Ho, Wo) — wrapper-side layout
    # plumbing; crop padded rows/cols BEFORE interleaving (padded lanes hold
    # tanh(relu(bias)) garbage by construction).
    phases = out[:, :, :, :, :H, :W]                       # (N, C, 2, 2, H, W)
    y = phases.transpose(0, 1, 4, 2, 5, 3).reshape(N, C_OUT, 2 * H, 2 * W)
    return y[:, :, :Ho, :Wo]


def reference_forward(x, weight, bias):
    # Standard ConvTranspose2d-as-dilated-conv reference (matches PyTorch).
    w_conv = jnp.flip(jnp.transpose(weight, (1, 0, 2, 3)), axis=(2, 3))
    edge = K - 1 - PAD
    y = jax.lax.conv_general_dilated(
        x.astype(jnp.float32), w_conv.astype(jnp.float32),
        window_strides=(1, 1),
        padding=[(edge, edge), (edge, edge)],
        lhs_dilation=(STRIDE, STRIDE),
        dimension_numbers=("NCHW", "OIHW", "NCHW"),
    ) + bias[None, :, None, None]
    return jnp.abs(jnp.tanh(jnp.maximum(y, 0.0)))


if __name__ == "__main__":
    key = jax.random.PRNGKey(0)
    kx, kw, kb = jax.random.split(key, 3)

    N, H, W = 2, 16, 16
    x = jax.random.normal(kx, (N, C_IN, H, W), dtype=jnp.float32)

    # deterministic parameter init (PyTorch-style uniform(-1/sqrt(fan), 1/sqrt(fan)))
    fan = C_IN * K * K
    bound = 1.0 / (fan ** 0.5)
    weight = jax.random.uniform(kw, (C_IN, C_OUT, K, K), jnp.float32, -bound, bound)
    bias = jax.random.uniform(kb, (C_OUT,), jnp.float32, -bound, bound)

    roll_like_jnp = _roll_matches_jnp()
    fwd = jax.jit(functools.partial(model_forward, roll_like_jnp=roll_like_jnp))
    out = jax.block_until_ready(fwd(x, weight, bias))

    ref = reference_forward(x, weight, bias)
    assert out.shape == (N, C_OUT, 31, 31), out.shape
    assert jnp.allclose(out, ref, atol=1e-5, rtol=1e-5), "mismatch vs reference"

    print("KERNEL_OK")
</pallas_src>

<mosaic_0001>
module attributes {stable_mosaic.version = 11 : i64} {
  func.func @k(%arg0: memref<8x128xf32, #tpu.memory_space<vmem>>, %arg1: memref<8x128xf32, #tpu.memory_space<vmem>>) attributes {dimension_semantics = [], scalar_prefetch = 0 : i64, scratch_operands = 0 : i64, tpu.core_type = #tpu.core_type<tc>} {
    %c0 = arith.constant 0 : index
    %c0_0 = arith.constant 0 : index
    %0 = vector.load %arg0[%c0, %c0_0] : memref<8x128xf32, #tpu.memory_space<vmem>>, vector<8x128xf32>
    %c1_i32 = arith.constant 1 : i32
    %1 = tpu.dynamic_rotate %0 by %c1_i32 dim 1 : vector<8x128xf32>, i32 -> vector<8x128xf32>
    %c0_1 = arith.constant 0 : index
    %c0_2 = arith.constant 0 : index
    %2 = vector.load %arg1[%c0_1, %c0_2] : memref<8x128xf32, #tpu.memory_space<vmem>>, vector<8x128xf32>
    tpu.vector_store %arg1[%c0_1, %c0_2], %1 {strides = array<i32>} : memref<8x128xf32, #tpu.memory_space<vmem>>, vector<8x128xf32>,
    return
  }
}

</mosaic_0001>

<llo_original>
// kernel: tpu_custom_call.1
$region0: #{tpu_custom_call.1}
  #allocation0 [shape = 'u32[]', space=smem, size = 0x4, offset = 0x4, fixed_abs, tag = 'smem constant byte address 0x4 - core index']
  #allocation1 [shape = 'u32[144,128]{1,0:T(1,128)}', space=vmem, size = 0x12000, scoped, tag = 'internal scratch']
  %s0 = inlined_call_operand.hbm [shape: f32[8,128], index: 0, kind: input, shape index: {}]
  %s1 = inlined_call_operand.hbm [shape: f32[8,128], index: 1, kind: output, shape index: {}]
  %s2 = sld [smem:[#allocation0]]
  $region18: #{tpu_custom_call.1} parent=0
    _
  %s4 = ssub.s32 1, %s2
  %s5 = scalar_select 0, %s4, %s2
  $region1: #{tpu_custom_call.1} parent=0
    #allocation2 [shape = 'u8[4096]{0}', space=vmem, size = 0x1000, scoped, tag = 'input window, operand 0, single buffered']
    #allocation3 [shape = 's32[1]{0}', space=sflag, size = 0x4, scoped, tag = 'scoped memory for tpu_custom_call.1']
    #allocation4 [shape = 's32[1]{0}', space=sflag, size = 0x4, scoped, tag = 'scoped memory for tpu_custom_call.1']
    #allocation5 [shape = 'u8[4096]{0}', space=vmem, size = 0x1000, scoped, tag = 'output window, operand 0, single buffered']
    %6 = vsyncpa [#allocation3], 0
    %7 = vsyncpa [#allocation4], 0
    // Predicated region
    $region2: #{tpu_custom_call.1} parent=1 // pred_check
      _
    $region3: #{tpu_custom_call.1} parent=1 // pred_check_branch
      %9 = sbr.rel (0) target = $region5
    $region4: #{tpu_custom_call.1} parent=1 // pred_region
      %s11 = ssub.s32 128, 128
      %12 = vsyncadd [#allocation3], %s11
      %s14 = sshll.u32 [#allocation2], 4
      %s15 = int_to_ptr.vmem [resolvable:$true] %s14
      %17 = dma.hbm_to_vmem [thread:$0]  %s0, 128, %s15, [#allocation3]
    $region5: #{tpu_custom_call.1} parent=1 // pred_fallthru
      _
    // Predicated region
    $region6: #{tpu_custom_call.1} parent=1 // pred_check
      _
    $region7: #{tpu_custom_call.1} parent=1 // pred_check_branch
      %19 = sbr.rel (0) target = $region9
    $region8: #{tpu_custom_call.1} parent=1 // pred_region
      %20 = dma.done [#allocation3], 128
    $region9: #{tpu_custom_call.1} parent=1 // pred_fallthru
      _
    %v21 = vld [vmem:[#allocation2] sm:$0xff]
    %22 = vrot.lane.b32.xlu0 %v21, 1
    %v23 = vpop.permute.xlu0 %22
    %24 = vst [vmem:[#allocation5] sm:$0xff] %v23
    // Predicated region
    $region10: #{tpu_custom_call.1} parent=1 // pred_check
      _
    $region11: #{tpu_custom_call.1} parent=1 // pred_check_branch
      %26 = sbr.rel (0) target = $region13
    $region12: #{tpu_custom_call.1} parent=1 // pred_region
      %s28 = ssub.s32 128, 128
      %29 = vsyncadd [#allocation4], %s28
      %s31 = sshll.u32 [#allocation5], 4
      %s32 = int_to_ptr.vmem [resolvable:$true] %s31
      %34 = dma.vmem_to_hbm [thread:$0]  %s32, 128, %s1, [#allocation4]
    $region13: #{tpu_custom_call.1} parent=1 // pred_fallthru
      _
    // Predicated region
    $region14: #{tpu_custom_call.1} parent=1 // pred_check
      _
    $region15: #{tpu_custom_call.1} parent=1 // pred_check_branch
      %36 = sbr.rel (0) target = $region17
    $region16: #{tpu_custom_call.1} parent=1 // pred_region
      %37 = dma.done [#allocation4], 128
    $region17: #{tpu_custom_call.1} parent=1 // pred_fallthru
      _
    %38 = vsyncpa [#allocation3], 1
    %39 = vsyncpa [#allocation4], 1

</llo_original>
